<compile_context>
chip_gen: v7x
topology: tpu7x:2x2x1
jax: 0.10.0
libtpu: 0.0.40
codegen_flags: <defaults>
</compile_context>

<pallas_src>
import math

import jax
import jax.numpy as jnp
from jax import lax
from jax.experimental import pallas as pl
from jax.experimental.pallas import tpu as pltpu


def _self_attention_body(x_ref, w1_ref, b1_ref, wk_ref, bk_ref, wv_ref, bv_ref,
                         wo_ref, bo_ref, out_ref, attnw_ref, q_sc, k_sc, v_sc):
    qi = pl.program_id(1)
    L, E = k_sc.shape              # full per-batch sequence length, embed dim
    Tq = out_ref.shape[1]          # query rows handled by this grid step

    # ---- once per batch element (first query tile): projections -> scratch ----
    @pl.when(qi == 0)
    def _():
        x = x_ref[0]                                                  # (L, E) bf16
        # Fused x-driven projections; columns = [scaled q-proj | key-Lin | value-Lin].
        h = jnp.dot(x, w1_ref[...], preferred_element_type=jnp.float32) + b1_ref[...]
        kin = h[:, E:2 * E]
        vin = h[:, 2 * E:]
        kin = jnp.where(kin > 0, kin, 0.01 * kin).astype(jnp.bfloat16)   # leaky_relu
        vin = jnp.where(vin > 0, vin, 0.01 * vin).astype(jnp.bfloat16)
        k = jnp.dot(kin, wk_ref[...], preferred_element_type=jnp.float32) + bk_ref[...]
        v = jnp.dot(vin, wv_ref[...], preferred_element_type=jnp.float32) + bv_ref[...]
        q_sc[...] = h[:, :E].astype(jnp.bfloat16)    # 1/sqrt(E) already folded in
        k_sc[...] = k.astype(jnp.bfloat16)
        v_sc[...] = v.astype(jnp.bfloat16)

    # ---- per query tile: attention over this batch element's full key axis ----
    if Tq == L:
        q = q_sc[...]
    else:
        q = q_sc[pl.ds(pl.multiple_of(qi * Tq, Tq), Tq), :]

    s = lax.dot_general(q, k_sc[...], (((1,), (1,)), ((), ())),
                        preferred_element_type=jnp.float32)           # (Tq, L) f32
    s = s - jnp.max(s, axis=-1, keepdims=True)
    p = jnp.exp(s)                                                    # unnormalized
    rinv = pl.reciprocal(jnp.sum(p, axis=-1, keepdims=True), approx=True)

    ctx = jnp.dot(p.astype(jnp.bfloat16), v_sc[...],
                  preferred_element_type=jnp.float32)                 # (Tq, E) f32
    ctx = ctx * rinv               # deferred softmax normalization: O(Tq*E), not O(Tq*L)
    out = jnp.dot(ctx.astype(jnp.bfloat16), wo_ref[...],
                  preferred_element_type=jnp.float32) + bo_ref[...]
    out_ref[0] = out.astype(out_ref.dtype)

    if attnw_ref is not None:
        attnw_ref[0] = (p * rinv).astype(attnw_ref.dtype)


def _kernel_with_weights(x_ref, w1_ref, b1_ref, wk_ref, bk_ref, wv_ref, bv_ref,
                         wo_ref, bo_ref, out_ref, attnw_ref, q_sc, k_sc, v_sc):
    _self_attention_body(x_ref, w1_ref, b1_ref, wk_ref, bk_ref, wv_ref, bv_ref,
                         wo_ref, bo_ref, out_ref, attnw_ref, q_sc, k_sc, v_sc)


def _kernel_no_weights(x_ref, w1_ref, b1_ref, wk_ref, bk_ref, wv_ref, bv_ref,
                       wo_ref, bo_ref, out_ref, q_sc, k_sc, v_sc):
    _self_attention_body(x_ref, w1_ref, b1_ref, wk_ref, bk_ref, wv_ref, bv_ref,
                         wo_ref, bo_ref, out_ref, None, q_sc, k_sc, v_sc)


def self_attention_pallas(x, params, *, need_weights=True, q_block=256):
    """x: (L, N, E). Returns (attn_output (L,N,E), attn_weights (N,L,L)),
    or just attn_output when need_weights=False."""
    L, N, E = x.shape

    # Query-tile size: full sequence for small L, otherwise an even tiling.
    Tq = min(q_block, L)
    if L % Tq != 0:
        Tq = L
    num_q = L // Tq

    # Batch-major layout + bf16 operands for the MXU (one cheap HBM transpose).
    xb = jnp.transpose(x, (1, 0, 2)).astype(jnp.bfloat16)             # (N, L, E)

    def w_spec(shape):
        return pl.BlockSpec(shape, lambda b, qi: (0,) * len(shape))

    in_specs = [
        pl.BlockSpec((1, L, E), lambda b, qi: (b, 0, 0)),             # x (per batch)
        w_spec((E, 3 * E)), w_spec((1, 3 * E)),                       # fused x-projections
        w_spec((E, E)), w_spec((1, E)),                               # MHA k in-proj
        w_spec((E, E)), w_spec((1, E)),                               # MHA v in-proj
        w_spec((E, E)), w_spec((1, E)),                               # MHA out-proj
    ]
    out_spec_o = pl.BlockSpec((1, Tq, E), lambda b, qi: (b, qi, 0))
    scratch = [pltpu.VMEM((L, E), jnp.bfloat16)] * 3                  # q / k / v cache

    if need_weights:
        kernel = _kernel_with_weights
        out_shape = (jax.ShapeDtypeStruct((N, L, E), x.dtype),
                     jax.ShapeDtypeStruct((N, L, L), jnp.float32))
        out_specs = (out_spec_o,
                     pl.BlockSpec((1, Tq, L), lambda b, qi: (b, qi, 0)))
    else:
        kernel = _kernel_no_weights
        out_shape = jax.ShapeDtypeStruct((N, L, E), x.dtype)
        out_specs = out_spec_o

    result = pl.pallas_call(
        kernel,
        out_shape=out_shape,
        grid=(N, num_q),
        in_specs=in_specs,
        out_specs=out_specs,
        scratch_shapes=scratch,
        compiler_params=pltpu.CompilerParams(
            dimension_semantics=("parallel", "arbitrary")),
    )(xb, params["w1_t"], params["b1"], params["wk2_t"], params["bk2"],
      params["wv2_t"], params["bv2"], params["wo_t"], params["bo"])

    if need_weights:
        out_b, attnw = result
        return jnp.transpose(out_b, (1, 0, 2)), attnw
    return jnp.transpose(result, (1, 0, 2))


def init_params(key, E, dtype=jnp.bfloat16):
    """Deterministic init mirroring the PyTorch module's parameter shapes,
    packed once (host-side) into the fused bf16 layout the kernel consumes.
    Biases stay f32 (added after f32-accumulated matmuls)."""
    ks = jax.random.split(key, 8)
    bound = 1.0 / math.sqrt(E)
    u = lambda k, shape: jax.random.uniform(k, shape, jnp.float32, -bound, bound)

    wk1 = u(ks[0], (E, E)); bk1 = u(ks[1], (1, E))          # self.key   Linear
    wv1 = u(ks[2], (E, E)); bv1 = u(ks[3], (1, E))          # self.value Linear
    in_proj_w = u(ks[4], (3 * E, E))                        # MHA in_proj_weight
    in_proj_b = u(ks[5], (1, 3 * E))                        # MHA in_proj_bias
    wo = u(ks[6], (E, E)); bo = u(ks[7], (1, E))            # MHA out_proj

    wq, wk2, wv2 = in_proj_w[:E], in_proj_w[E:2 * E], in_proj_w[2 * E:]
    bq, bk2, bv2 = in_proj_b[:, :E], in_proj_b[:, E:2 * E], in_proj_b[:, 2 * E:]

    # PyTorch Linear computes y = x @ W.T + b, hence the transposes.
    # MHA single-head 1/sqrt(E) query scaling is folded into wq/bq here.
    scale = 1.0 / math.sqrt(E)
    w1_t = jnp.concatenate([wq.T * scale, wk1.T, wv1.T], axis=1).astype(dtype)
    b1 = jnp.concatenate([bq * scale, bk1, bv1], axis=1)

    return dict(
        w1_t=w1_t, b1=b1,
        wk2_t=wk2.T.astype(dtype), bk2=bk2,
        wv2_t=wv2.T.astype(dtype), bv2=bv2,
        wo_t=wo.T.astype(dtype), bo=bo,
    )


def self_attention_reference(x, params):
    """Pure-JAX reference with identical math (f32 compute on the bf16-rounded
    operands the kernel consumes)."""
    L, N, E = x.shape
    f32 = lambda a: a.astype(jnp.float32)
    x2 = f32(x.astype(jnp.bfloat16)).reshape(L * N, E)

    h = x2 @ f32(params["w1_t"]) + params["b1"]
    q = h[:, :E]                                            # scale already folded in
    kin = h[:, E:2 * E]; vin = h[:, 2 * E:]
    kin = jnp.where(kin > 0, kin, 0.01 * kin)
    vin = jnp.where(vin > 0, vin, 0.01 * vin)
    k = kin @ f32(params["wk2_t"]) + params["bk2"]
    v = vin @ f32(params["wv2_t"]) + params["bv2"]

    def per_batch(t):
        return jnp.transpose(t.reshape(L, N, E), (1, 0, 2))   # (N, L, E)

    q3, k3, v3 = per_batch(q), per_batch(k), per_batch(v)
    s = jnp.einsum("bqd,bkd->bqk", q3, k3)
    p = jax.nn.softmax(s, axis=-1)
    ctx = jnp.einsum("bqk,bkd->bqd", p, v3)                   # (N, L, E)
    out = (jnp.transpose(ctx, (1, 0, 2)).reshape(L * N, E) @ f32(params["wo_t"])
           + params["bo"])
    return out.reshape(L, N, E), p


if __name__ == "__main__":
    L, N, E = 8, 2, 32   # seq_len, batch, embed_dim
    root = jax.random.PRNGKey(0)
    kx, kp = jax.random.split(root)
    x = jax.random.normal(kx, (L, N, E), jnp.float32)
    params = init_params(kp, E)

    run = jax.jit(self_attention_pallas,
                  static_argnames=("need_weights", "q_block"))
    attn_out, attn_w = run(x, params, need_weights=True)
    attn_out_only = run(x, params, need_weights=False)
    jax.block_until_ready((attn_out, attn_w, attn_out_only))

    assert attn_out.shape == (L, N, E)
    assert attn_w.shape == (N, L, L)
    assert attn_out_only.shape == (L, N, E)

    with jax.default_matmul_precision("highest"):
        ref_out, ref_w = self_attention_reference(x, params)
    assert jnp.allclose(attn_out, ref_out, atol=2e-2, rtol=2e-2)
    assert jnp.allclose(attn_w, ref_w, atol=2e-2, rtol=2e-2)
    assert jnp.allclose(attn_out_only, ref_out, atol=2e-2, rtol=2e-2)

    print("KERNEL_OK")
</pallas_src>

<mosaic_0001>
module attributes {stable_mosaic.version = 11 : i64} {
  func.func @_kernel_with_weights(%arg0: i32, %arg1: i32, %arg2: memref<1x8x32xbf16, #tpu.memory_space<vmem>>, %arg3: memref<32x96xbf16, #tpu.memory_space<vmem>>, %arg4: memref<1x96xf32, #tpu.memory_space<vmem>>, %arg5: memref<32x32xbf16, #tpu.memory_space<vmem>>, %arg6: memref<1x32xf32, #tpu.memory_space<vmem>>, %arg7: memref<32x32xbf16, #tpu.memory_space<vmem>>, %arg8: memref<1x32xf32, #tpu.memory_space<vmem>>, %arg9: memref<32x32xbf16, #tpu.memory_space<vmem>>, %arg10: memref<1x32xf32, #tpu.memory_space<vmem>>, %arg11: memref<1x8x32xf32, #tpu.memory_space<vmem>>, %arg12: memref<1x8x8xf32, #tpu.memory_space<vmem>>, %arg13: memref<8x32xbf16, #tpu.memory_space<vmem>>, %arg14: memref<8x32xbf16, #tpu.memory_space<vmem>>, %arg15: memref<8x32xbf16, #tpu.memory_space<vmem>>) attributes {dimension_semantics = [#tpu.dimension_semantics<parallel>, #tpu.dimension_semantics<arbitrary>], iteration_bounds = array<i64: 2, 1>, scalar_prefetch = 0 : i64, scratch_operands = 3 : i64, tpu.core_type = #tpu.core_type<tc>, window_params = [{transform_indices = @transform_0, window_bounds = array<i64: 1, 8, 32>}, {pipeline_mode = #tpu.pipeline_mode<synchronous>, transform_indices = @transform_1, window_bounds = array<i64: 32, 96>}, {pipeline_mode = #tpu.pipeline_mode<synchronous>, transform_indices = @transform_2, window_bounds = array<i64: 1, 96>}, {pipeline_mode = #tpu.pipeline_mode<synchronous>, transform_indices = @transform_3, window_bounds = array<i64: 32, 32>}, {pipeline_mode = #tpu.pipeline_mode<synchronous>, transform_indices = @transform_4, window_bounds = array<i64: 1, 32>}, {pipeline_mode = #tpu.pipeline_mode<synchronous>, transform_indices = @transform_5, window_bounds = array<i64: 32, 32>}, {pipeline_mode = #tpu.pipeline_mode<synchronous>, transform_indices = @transform_6, window_bounds = array<i64: 1, 32>}, {pipeline_mode = #tpu.pipeline_mode<synchronous>, transform_indices = @transform_7, window_bounds = array<i64: 32, 32>}, {pipeline_mode = #tpu.pipeline_mode<synchronous>, transform_indices = @transform_8, window_bounds = array<i64: 1, 32>}, {transform_indices = @transform_9, window_bounds = array<i64: 1, 8, 32>}, {transform_indices = @transform_10, window_bounds = array<i64: 1, 8, 8>}]} {
    %c0_i32 = arith.constant 0 : i32
    %0 = arith.cmpi eq, %arg1, %c0_i32 : i32
    %1 = arith.extui %0 : i1 to i32
    %c0_i32_0 = arith.constant 0 : i32
    %2 = arith.cmpi ne, %1, %c0_i32_0 : i32
    scf.if %2 {
      %c0_20 = arith.constant 0 : index
      %c0_21 = arith.constant 0 : index
      %c0_22 = arith.constant 0 : index
      %33 = vector.load %arg2[%c0_20, %c0_21, %c0_22] : memref<1x8x32xbf16, #tpu.memory_space<vmem>>, vector<1x8x32xbf16>
      %34 = vector.shape_cast %33 : vector<1x8x32xbf16> to vector<8x32xbf16>
      %c0_23 = arith.constant 0 : index
      %c0_24 = arith.constant 0 : index
      %35 = vector.load %arg3[%c0_23, %c0_24] : memref<32x96xbf16, #tpu.memory_space<vmem>>, vector<32x96xbf16>
      %cst_25 = arith.constant dense<0.000000e+00> : vector<8x96xf32>
      %36 = tpu.matmul %34, %35, %cst_25 {dimension_numbers = #tpu.dot_dimension_numbers<[1], [0], [0], [1], [0, 0, 1, 1], [], []>} : vector<8x32xbf16>, vector<32x96xbf16>, vector<8x96xf32> -> vector<8x96xf32>
      %c0_26 = arith.constant 0 : index
      %c0_27 = arith.constant 0 : index
      %37 = vector.load %arg4[%c0_26, %c0_27] : memref<1x96xf32, #tpu.memory_space<vmem>>, vector<1x96xf32>
      %38 = vector.broadcast %37 : vector<1x96xf32> to vector<8x96xf32>
      %39 = arith.addf %36, %38 : vector<8x96xf32>
      %40 = vector.extract_strided_slice %39 {offsets = [0, 32], sizes = [8, 32], strides = [1, 1]} : vector<8x96xf32> to vector<8x32xf32>
      %41 = vector.extract_strided_slice %39 {offsets = [0, 64], sizes = [8, 32], strides = [1, 1]} : vector<8x96xf32> to vector<8x32xf32>
      %cst_28 = arith.constant 0.000000e+00 : f32
      %42 = vector.broadcast %cst_28 : f32 to vector<8x32xf32>
      %43 = arith.cmpf ogt, %40, %42 : vector<8x32xf32>
      %cst_29 = arith.constant 0.00999999977 : f32
      %44 = vector.broadcast %cst_29 : f32 to vector<8x32xf32>
      %45 = arith.mulf %44, %40 : vector<8x32xf32>
      %46 = arith.select %43, %40, %45 : vector<8x32xi1>, vector<8x32xf32>
      %47 = arith.truncf %46 : vector<8x32xf32> to vector<8x32xbf16>
      %cst_30 = arith.constant 0.000000e+00 : f32
      %48 = vector.broadcast %cst_30 : f32 to vector<8x32xf32>
      %49 = arith.cmpf ogt, %41, %48 : vector<8x32xf32>
      %cst_31 = arith.constant 0.00999999977 : f32
      %50 = vector.broadcast %cst_31 : f32 to vector<8x32xf32>
      %51 = arith.mulf %50, %41 : vector<8x32xf32>
      %52 = arith.select %49, %41, %51 : vector<8x32xi1>, vector<8x32xf32>
      %53 = arith.truncf %52 : vector<8x32xf32> to vector<8x32xbf16>
      %c0_32 = arith.constant 0 : index
      %c0_33 = arith.constant 0 : index
      %54 = vector.load %arg5[%c0_32, %c0_33] : memref<32x32xbf16, #tpu.memory_space<vmem>>, vector<32x32xbf16>
      %cst_34 = arith.constant dense<0.000000e+00> : vector<8x32xf32>
      %55 = tpu.matmul %47, %54, %cst_34 {dimension_numbers = #tpu.dot_dimension_numbers<[1], [0], [0], [1], [0, 0, 1, 1], [], []>} : vector<8x32xbf16>, vector<32x32xbf16>, vector<8x32xf32> -> vector<8x32xf32>
      %c0_35 = arith.constant 0 : index
      %c0_36 = arith.constant 0 : index
      %56 = vector.load %arg6[%c0_35, %c0_36] : memref<1x32xf32, #tpu.memory_space<vmem>>, vector<1x32xf32>
      %57 = vector.broadcast %56 : vector<1x32xf32> to vector<8x32xf32>
      %58 = arith.addf %55, %57 : vector<8x32xf32>
      %c0_37 = arith.constant 0 : index
      %c0_38 = arith.constant 0 : index
      %59 = vector.load %arg7[%c0_37, %c0_38] : memref<32x32xbf16, #tpu.memory_space<vmem>>, vector<32x32xbf16>
      %cst_39 = arith.constant dense<0.000000e+00> : vector<8x32xf32>
      %60 = tpu.matmul %53, %59, %cst_39 {dimension_numbers = #tpu.dot_dimension_numbers<[1], [0], [0], [1], [0, 0, 1, 1], [], []>} : vector<8x32xbf16>, vector<32x32xbf16>, vector<8x32xf32> -> vector<8x32xf32>
      %c0_40 = arith.constant 0 : index
      %c0_41 = arith.constant 0 : index
      %61 = vector.load %arg8[%c0_40, %c0_41] : memref<1x32xf32, #tpu.memory_space<vmem>>, vector<1x32xf32>
      %62 = vector.broadcast %61 : vector<1x32xf32> to vector<8x32xf32>
      %63 = arith.addf %60, %62 : vector<8x32xf32>
      %64 = vector.extract_strided_slice %39 {offsets = [0, 0], sizes = [8, 32], strides = [1, 1]} : vector<8x96xf32> to vector<8x32xf32>
      %65 = arith.truncf %64 : vector<8x32xf32> to vector<8x32xbf16>
      %c0_42 = arith.constant 0 : index
      %c0_43 = arith.constant 0 : index
      %66 = vector.load %arg13[%c0_42, %c0_43] : memref<8x32xbf16, #tpu.memory_space<vmem>>, vector<8x32xbf16>
      tpu.vector_store %arg13[%c0_42, %c0_43], %65 {strides = array<i32>} : memref<8x32xbf16, #tpu.memory_space<vmem>>, vector<8x32xbf16>,
      %67 = arith.truncf %58 : vector<8x32xf32> to vector<8x32xbf16>
      %c0_44 = arith.constant 0 : index
      %c0_45 = arith.constant 0 : index
      %68 = vector.load %arg14[%c0_44, %c0_45] : memref<8x32xbf16, #tpu.memory_space<vmem>>, vector<8x32xbf16>
      tpu.vector_store %arg14[%c0_44, %c0_45], %67 {strides = array<i32>} : memref<8x32xbf16, #tpu.memory_space<vmem>>, vector<8x32xbf16>,
      %69 = arith.truncf %63 : vector<8x32xf32> to vector<8x32xbf16>
      %c0_46 = arith.constant 0 : index
      %c0_47 = arith.constant 0 : index
      %70 = vector.load %arg15[%c0_46, %c0_47] : memref<8x32xbf16, #tpu.memory_space<vmem>>, vector<8x32xbf16>
      tpu.vector_store %arg15[%c0_46, %c0_47], %69 {strides = array<i32>} : memref<8x32xbf16, #tpu.memory_space<vmem>>, vector<8x32xbf16>,
    } else {
    }
    %c0 = arith.constant 0 : index
    %c0_1 = arith.constant 0 : index
    %3 = vector.load %arg13[%c0, %c0_1] : memref<8x32xbf16, #tpu.memory_space<vmem>>, vector<8x32xbf16>
    %c0_2 = arith.constant 0 : index
    %c0_3 = arith.constant 0 : index
    %4 = vector.load %arg14[%c0_2, %c0_3] : memref<8x32xbf16, #tpu.memory_space<vmem>>, vector<8x32xbf16>
    %cst = arith.constant dense<0.000000e+00> : vector<8x8xf32>
    %5 = tpu.matmul %3, %4, %cst {dimension_numbers = #tpu.dot_dimension_numbers<[1], [1], [0], [0], [0, 0, 1, 0], [], []>} : vector<8x32xbf16>, vector<8x32xbf16>, vector<8x8xf32> -> vector<8x8xf32>
    %cst_4 = arith.constant dense<0xFF800000> : vector<8xf32>
    %6 = vector.multi_reduction <maximumf>, %5, %cst_4 [1] : vector<8x8xf32> to vector<8xf32>
    %7 = vector.shape_cast %6 : vector<8xf32> to vector<8x1xf32>
    %8 = vector.broadcast %7 : vector<8x1xf32> to vector<8x8xf32>
    %9 = arith.subf %5, %8 : vector<8x8xf32>
    %10 = math.exp %9 : vector<8x8xf32>
    %cst_5 = arith.constant dense<0.000000e+00> : vector<8xf32>
    %11 = vector.multi_reduction <add>, %10, %cst_5 [1] : vector<8x8xf32> to vector<8xf32>
    %12 = vector.shape_cast %11 : vector<8xf32> to vector<8x1xf32>
    %13 = tpu.reciprocal %12 {approx = true} : vector<8x1xf32> -> vector<8x1xf32>
    %14 = arith.truncf %10 : vector<8x8xf32> to vector<8x8xbf16>
    %c0_6 = arith.constant 0 : index
    %c0_7 = arith.constant 0 : index
    %15 = vector.load %arg15[%c0_6, %c0_7] : memref<8x32xbf16, #tpu.memory_space<vmem>>, vector<8x32xbf16>
    %cst_8 = arith.constant dense<0.000000e+00> : vector<8x32xf32>
    %16 = tpu.matmul %14, %15, %cst_8 {dimension_numbers = #tpu.dot_dimension_numbers<[1], [0], [0], [1], [0, 0, 1, 1], [], []>} : vector<8x8xbf16>, vector<8x32xbf16>, vector<8x32xf32> -> vector<8x32xf32>
    %17 = vector.broadcast %13 : vector<8x1xf32> to vector<8x32xf32>
    %18 = arith.mulf %16, %17 : vector<8x32xf32>
    %19 = arith.truncf %18 : vector<8x32xf32> to vector<8x32xbf16>
    %c0_9 = arith.constant 0 : index
    %c0_10 = arith.constant 0 : index
    %20 = vector.load %arg9[%c0_9, %c0_10] : memref<32x32xbf16, #tpu.memory_space<vmem>>, vector<32x32xbf16>
    %cst_11 = arith.constant dense<0.000000e+00> : vector<8x32xf32>
    %21 = tpu.matmul %19, %20, %cst_11 {dimension_numbers = #tpu.dot_dimension_numbers<[1], [0], [0], [1], [0, 0, 1, 1], [], []>} : vector<8x32xbf16>, vector<32x32xbf16>, vector<8x32xf32> -> vector<8x32xf32>
    %c0_12 = arith.constant 0 : index
    %c0_13 = arith.constant 0 : index
    %22 = vector.load %arg10[%c0_12, %c0_13] : memref<1x32xf32, #tpu.memory_space<vmem>>, vector<1x32xf32>
    %23 = vector.broadcast %22 : vector<1x32xf32> to vector<8x32xf32>
    %24 = arith.addf %21, %23 : vector<8x32xf32>
    %c0_14 = arith.constant 0 : index
    %c0_15 = arith.constant 0 : index
    %c0_16 = arith.constant 0 : index
    %25 = vector.load %arg11[%c0_14, %c0_15, %c0_16] : memref<1x8x32xf32, #tpu.memory_space<vmem>>, vector<1x8x32xf32>
    %26 = vector.shape_cast %25 : vector<1x8x32xf32> to vector<8x32xf32>
    %27 = vector.shape_cast %24 : vector<8x32xf32> to vector<1x8x32xf32>
    tpu.vector_store %arg11[%c0_14, %c0_15, %c0_16], %27 {strides = array<i32>} : memref<1x8x32xf32, #tpu.memory_space<vmem>>, vector<1x8x32xf32>,
    %28 = vector.broadcast %13 : vector<8x1xf32> to vector<8x8xf32>
    %29 = arith.mulf %10, %28 : vector<8x8xf32>
    %c0_17 = arith.constant 0 : index
    %c0_18 = arith.constant 0 : index
    %c0_19 = arith.constant 0 : index
    %30 = vector.load %arg12[%c0_17, %c0_18, %c0_19] : memref<1x8x8xf32, #tpu.memory_space<vmem>>, vector<1x8x8xf32>
    %31 = vector.shape_cast %30 : vector<1x8x8xf32> to vector<8x8xf32>
    %32 = vector.shape_cast %29 : vector<8x8xf32> to vector<1x8x8xf32>
    tpu.vector_store %arg12[%c0_17, %c0_18, %c0_19], %32 {strides = array<i32>} : memref<1x8x8xf32, #tpu.memory_space<vmem>>, vector<1x8x8xf32>,
    return
  }
  func.func @transform_0(%arg0: i32, %arg1: i32) -> (i32, i32, i32) {
    %c0_i32 = arith.constant 0 : i32
    %c0_i32_0 = arith.constant 0 : i32
    %c0_i32_1 = arith.constant 0 : i32
    return %arg0, %c0_i32, %c0_i32_0 : i32, i32, i32
  }
  func.func @transform_1(%arg0: i32, %arg1: i32) -> (i32, i32) {
    %c0_i32 = arith.constant 0 : i32
    %c0_i32_0 = arith.constant 0 : i32
    %c0_i32_1 = arith.constant 0 : i32
    return %c0_i32, %c0_i32_0 : i32, i32
  }
  func.func @transform_2(%arg0: i32, %arg1: i32) -> (i32, i32) {
    %c0_i32 = arith.constant 0 : i32
    %c0_i32_0 = arith.constant 0 : i32
    %c0_i32_1 = arith.constant 0 : i32
    return %c0_i32, %c0_i32_0 : i32, i32
  }
  func.func @transform_3(%arg0: i32, %arg1: i32) -> (i32, i32) {
    %c0_i32 = arith.constant 0 : i32
    %c0_i32_0 = arith.constant 0 : i32
    %c0_i32_1 = arith.constant 0 : i32
    return %c0_i32, %c0_i32_0 : i32, i32
  }
  func.func @transform_4(%arg0: i32, %arg1: i32) -> (i32, i32) {
    %c0_i32 = arith.constant 0 : i32
    %c0_i32_0 = arith.constant 0 : i32
    %c0_i32_1 = arith.constant 0 : i32
    return %c0_i32, %c0_i32_0 : i32, i32
  }
  func.func @transform_5(%arg0: i32, %arg1: i32) -> (i32, i32) {
    %c0_i32 = arith.constant 0 : i32
    %c0_i32_0 = arith.constant 0 : i32
    %c0_i32_1 = arith.constant 0 : i32
    return %c0_i32, %c0_i32_0 : i32, i32
  }
  func.func @transform_6(%arg0: i32, %arg1: i32) -> (i32, i32) {
    %c0_i32 = arith.constant 0 : i32
    %c0_i32_0 = arith.constant 0 : i32
    %c0_i32_1 = arith.constant 0 : i32
    return %c0_i32, %c0_i32_0 : i32, i32
  }
  func.func @transform_7(%arg0: i32, %arg1: i32) -> (i32, i32) {
    %c0_i32 = arith.constant 0 : i32
    %c0_i32_0 = arith.constant 0 : i32
    %c0_i32_1 = arith.constant 0 : i32
    return %c0_i32, %c0_i32_0 : i32, i32
  }
  func.func @transform_8(%arg0: i32, %arg1: i32) -> (i32, i32) {
    %c0_i32 = arith.constant 0 : i32
    %c0_i32_0 = arith.constant 0 : i32
    %c0_i32_1 = arith.constant 0 : i32
    return %c0_i32, %c0_i32_0 : i32, i32
  }
  func.func @transform_9(%arg0: i32, %arg1: i32) -> (i32, i32, i32) {
    %c0_i32 = arith.constant 0 : i32
    %c0_i32_0 = arith.constant 0 : i32
    return %arg0, %arg1, %c0_i32 : i32, i32, i32
  }
  func.func @transform_10(%arg0: i32, %arg1: i32) -> (i32, i32, i32) {
    %c0_i32 = arith.constant 0 : i32
    %c0_i32_0 = arith.constant 0 : i32
    return %arg0, %arg1, %c0_i32 : i32, i32, i32
  }
}

</mosaic_0001>

<llo_original>
// kernel: self_attention_pallas.1
$region0: #{self_attention_pallas.1}
  #allocation0 [shape = 'u32[]', space=smem, size = 0x4, offset = 0x4, fixed_abs, tag = 'smem constant byte address 0x4 - core index']
  #allocation1 [shape = 'u32[144,128]{1,0:T(1,128)}', space=vmem, size = 0x12000, scoped, tag = 'internal scratch']
  #allocation2 [shape = 'bf16[8,32]{1,0:T(8,128)(2,1)}', space=vmem, size = 0x800, scoped, tag = 'scratch operand']
  #allocation3 [shape = 'bf16[8,32]{1,0:T(8,128)(2,1)}', space=vmem, size = 0x800, scoped, tag = 'scratch operand']
  #allocation4 [shape = 'bf16[8,32]{1,0:T(8,128)(2,1)}', space=vmem, size = 0x800, scoped, tag = 'scratch operand']
  %s0 = inlined_call_operand.vmem [shape: bf16[2,8,32], index: 0, kind: input, shape index: {}]
  %s1 = inlined_call_operand.vmem [shape: bf16[32,96], index: 1, kind: input, shape index: {}]
  %s2 = inlined_call_operand.vmem [shape: f32[1,96], index: 2, kind: input, shape index: {}]
  %s3 = inlined_call_operand.vmem [shape: bf16[32,32], index: 3, kind: input, shape index: {}]
  %s4 = inlined_call_operand.vmem [shape: f32[1,32], index: 4, kind: input, shape index: {}]
  %s5 = inlined_call_operand.vmem [shape: bf16[32,32], index: 5, kind: input, shape index: {}]
  %s6 = inlined_call_operand.hbm [shape: f32[1,32], index: 6, kind: input, shape index: {}]
  %s7 = inlined_call_operand.hbm [shape: bf16[32,32], index: 7, kind: input, shape index: {}]
  %s8 = inlined_call_operand.hbm [shape: f32[1,32], index: 8, kind: input, shape index: {}]
  %s9 = inlined_call_operand.vmem [shape: f32[2,8,32], index: 9, kind: output, shape index: {0}]
  %s10 = inlined_call_operand.hbm [shape: f32[2,8,8], index: 10, kind: output, shape index: {1}]
  %11 = xla_tuple %s9, %s10
  %s12 = sld [smem:[#allocation0]]
  $region93: #{self_attention_pallas.1} parent=0
    _
  %s14 = ssub.s32 1, %s12
  %s15 = scalar_select 0, %s14, %s12
  $region1: #{self_attention_pallas.1} parent=0
    #allocation5 [shape = 'u8[512]{0}', space=vmem, size = 0x400, scoped, tag = 'input window, operand 6, single buffered']
    #allocation6 [shape = 's32[2]{0}', space=sflag, size = 0x8, scoped, tag = 'scoped memory for self_attention_pallas.1']
    #allocation7 [shape = 's32[2]{0}', space=sflag, size = 0x8, scoped, tag = 'scoped memory for self_attention_pallas.1']
    #allocation8 [shape = 'u8[8192]{0}', space=vmem, size = 0x2000, scoped, tag = 'input window, operand 7, single buffered']
    #allocation9 [shape = 's32[1]{0}', space=sflag, size = 0x4, scoped, tag = 'scoped memory for self_attention_pallas.1']
    #allocation10 [shape = 'u8[512]{0}', space=vmem, size = 0x400, scoped, tag = 'input window, operand 8, single buffered']
    #allocation11 [shape = 'u8[8192]{0}', space=vmem, size = 0x2000, scoped, tag = 'output window, operand 1']
    %16 = vsyncpa [#allocation6], 0
    %17 = vsyncpa [#allocation9], 0
    %18 = vsyncpa [#allocation7], 0
    %s19 = scalar_lea.sflag [#allocation7], 1
    %20 = vsyncpa %s19, 0
    loop: start=0, step=1, limit=4
    $region2: #{self_attention_pallas.1} parent=1 // loop_pre_header
      _
    $region3: #{self_attention_pallas.1} parent=1 // loop_header
      %s22 = sphi 0, %s26
      %p23 = scmp.ge.s32.totalorder %s22, 4
      %s29 = sphi 0, %s41
      %s30 = sphi 0, %s37
      %s31 = sphi 0, %s29
      %s32 = sphi 0, %s30
      %s33 = sphi 0, %s31
      %s34 = sphi 0, %s32
      %s44 = sphi 0, %s46
      %s47 = sphi 0, %s44
      %s48 = sphi 0, %s47
      %s64 = sphi 0, %s48
      %s68 = sphi 0, %s68
      %s70 = sphi 0, %s68
      %s71 = sphi 0, %s70
      %s85 = sphi 0, %s71
      %s89 = sphi 0, %s89
      %s91 = sphi 0, %s89
      %s92 = sphi 0, %s91
      %s106 = sphi 0, %s92
      %s110 = sphi 0, %s110
      %s112 = sphi 0, %s110
      %s113 = sphi 0, %s112
      %s127 = sphi 0, %s113
      %s131 = sphi 0, %s131
      %s133 = sphi 0, %s131
      %s134 = sphi 0, %s133
      %s148 = sphi 0, %s134
      %s152 = sphi 0, %s152
      %s154 = sphi 0, %s152
      %s155 = sphi 0, %s154
      %s169 = sphi 0, %s155
      %s173 = sphi 0, %s173
      %s175 = sphi 0, %s173
      %s176 = sphi 0, %s175
      %s190 = sphi 0, %s176
      %s194 = sphi 0, %s194
      %s196 = sphi 0, %s194
      %s197 = sphi 0, %s196
      %s211 = sphi 0, %s197
      %s215 = sphi 0, %s215
      %s217 = sphi 0, %s215
      %s218 = sphi 0, %s217
      %s232 = sphi 0, %s218
      %s240 = sphi 0, %s242
      %s243 = sphi 0, %s240
      %s244 = sphi 0, %s243
      %s260 = sphi 0, %s244
      %s268 = sphi 0, %s270
      %s271 = sphi 0, %s268
      %s272 = sphi 0, %s271
      %s288 = sphi 0, %s272
    $region4: #{self_attention_pallas.1} parent=1 // loop_header_branch
      %25 = sbr.rel (%p23) target = $region8
    $region5: #{self_attention_pallas.1} parent=1 // loop_body
      %s27 = ssub.s32 %s22, 1
      %s28 = ssub.s32 %s22, 2
      %s35 = sadd.s32 1, %s30
      %p36 = scmp.ge.s32.totalorder %s35, 1
      %s37 = scalar_select %p36, 0, %s35
      %s38 = sadd.s32 1, %s29
      %s39 = scalar_select %p36, %s38, %s29
      %p40 = scmp.ge.s32.totalorder %s39, 2
      %s41 = scalar_select %p40, 0, %s39
      %s42 = ssub.s32 %s29, %s41
      %p43 = scmp.eq.s32.totalorder %s42, 0
      %s45 = sadd.s32 %s44, 1
      %s46 = scalar_select %p43, %s44, %s45
      %p49 = pneg %p43
      %p50 = scmp.eq.s32.totalorder %s22, 1
      %p51 = por %p49, %p50
      %p52 = scmp.ne.s32.totalorder %s44, %s47
      %p53 = scmp.eq.s32.totalorder %s22, 0
      %p54 = por %p52, %p53
      %p55 = scmp.ne.s32.totalorder %s44, %s47
      %p56 = scmp.eq.s32.totalorder %s27, 1
      %p57 = por %p55, %p56
      %p58 = scmp.ne.s32.totalorder %s47, %s48
      %p59 = scmp.eq.s32.totalorder %s27, 0
      %p60 = por %p58, %p59
      %p61 = scmp.ne.s32.totalorder %s47, %s48
      %p62 = scmp.eq.s32.totalorder %s28, 1
      %p63 = por %p61, %p62
      %p65 = scmp.ne.s32.totalorder %s48, %s64
      %p66 = scmp.eq.s32.totalorder %s28, 0
      %p67 = por %p65, %p66
      %s69 = sadd.s32 %s68, 1
      %p72 = scmp.eq.s32.totalorder %s22, 1
      %p73 = scmp.ne.s32.totalorder %s68, %s70
      %p74 = scmp.eq.s32.totalorder %s22, 0
      %p75 = por %p73, %p74
      %p76 = scmp.ne.s32.totalorder %s68, %s70
      %p77 = scmp.eq.s32.totalorder %s27, 1
      %p78 = por %p76, %p77
      %p79 = scmp.ne.s32.totalorder %s70, %s71
      %p80 = scmp.eq.s32.totalorder %s27, 0
      %p81 = por %p79, %p80
      %p82 = scmp.ne.s32.totalorder %s70, %s71
      %p83 = scmp.eq.s32.totalorder %s28, 1
      %p84 = por %p82, %p83
      %p86 = scmp.ne.s32.totalorder %s71, %s85
      %p87 = scmp.eq.s32.totalorder %s28, 0
      %p88 = por %p86, %p87
      %s90 = sadd.s32 %s89, 1
      %p93 = scmp.eq.s32.totalorder %s22, 1
      %p94 = scmp.ne.s32.totalorder %s89, %s91
      %p95 = scmp.eq.s32.totalorder %s22, 0
      %p96 = por %p94, %p95
      %p97 = scmp.ne.s32.totalorder %s89, %s91
      %p98 = scmp.eq.s32.totalorder %s27, 1
      %p99 = por %p97, %p98
      %p100 = scmp.ne.s32.totalorder %s91, %s92
      %p101 = scmp.eq.s32.totalorder %s27, 0
      %p102 = por %p100, %p101
      %p103 = scmp.ne.s32.totalorder %s91, %s92
      %p104 = scmp.eq.s32.totalorder %s28, 1
      %p105 = por %p103, %p104
      %p107 = scmp.ne.s32.totalorder %s92, %s106
      %p108 = scmp.eq.s32.totalorder %s28, 0
      %p109 = por %p107, %p108
      %s111 = sadd.s32 %s110, 1
      %p114 = scmp.eq.s32.totalorder %s22, 1
      %p115 = scmp.ne.s32.totalorder %s110, %s112
      %p116 = scmp.eq.s32.totalorder %s22, 0
      %p117 = por %p115, %p116
      %p118 = scmp.ne.s32.totalorder %s110, %s112
      %p119 = scmp.eq.s32.totalorder %s27, 1
      %p120 = por %p118, %p119
      %p121 = scmp.ne.s32.totalorder %s112, %s113
      %p122 = scmp.eq.s32.totalorder %s27, 0
      %p123 = por %p121, %p122
      %p124 = scmp.ne.s32.totalorder %s112, %s113
      %p125 = scmp.eq.s32.totalorder %s28, 1
      %p126 = por %p124, %p125
      %p128 = scmp.ne.s32.totalorder %s113, %s127
      %p129 = scmp.eq.s32.totalorder %s28, 0
      %p130 = por %p128, %p129
      %s132 = sadd.s32 %s131, 1
      %p135 = scmp.eq.s32.totalorder %s22, 1
      %p136 = scmp.ne.s32.totalorder %s131, %s133
      %p137 = scmp.eq.s32.totalorder %s22, 0
      %p138 = por %p136, %p137
      %p139 = scmp.ne.s32.totalorder %s131, %s133
      %p140 = scmp.eq.s32.totalorder %s27, 1
      %p141 = por %p139, %p140
      %p142 = scmp.ne.s32.totalorder %s133, %s134
      %p143 = scmp.eq.s32.totalorder %s27, 0
      %p144 = por %p142, %p143
      %p145 = scmp.ne.s32.totalorder %s133, %s134
      %p146 = scmp.eq.s32.totalorder %s28, 1
      %p147 = por %p145, %p146
      %p149 = scmp.ne.s32.totalorder %s134, %s148
      %p150 = scmp.eq.s32.totalorder %s28, 0
      %p151 = por %p149, %p150
      %s153 = sadd.s32 %s152, 1
      %p156 = scmp.eq.s32.totalorder %s22, 1
      %p157 = scmp.ne.s32.totalorder %s152, %s154
      %p158 = scmp.eq.s32.totalorder %s22, 0
      %p159 = por %p157, %p158
      %p160 = scmp.ne.s32.totalorder %s152, %s154
      %p161 = scmp.eq.s32.totalorder %s27, 1
      %p162 = por %p160, %p161
      %p163 = scmp.ne.s32.totalorder %s154, %s155
      %p164 = scmp.eq.s32.totalorder %s27, 0
      %p165 = por %p163, %p164
      %p166 = scmp.ne.s32.totalorder %s154, %s155
      %p167 = scmp.eq.s32.totalorder %s28, 1
      %p168 = por %p166, %p167
      %p170 = scmp.ne.s32.totalorder %s155, %s169
      %p171 = scmp.eq.s32.totalorder %s28, 0
      %p172 = por %p170, %p171
      %s174 = sadd.s32 %s173, 1
      %p177 = scmp.eq.s32.totalorder %s22, 1
      %p178 = scmp.ne.s32.totalorder %s173, %s175
      %p179 = scmp.eq.s32.totalorder %s22, 0
      %p180 = por %p178, %p179
      %p181 = scmp.ne.s32.totalorder %s173, %s175
      %p182 = scmp.eq.s32.totalorder %s27, 1
      %p183 = por %p181, %p182
      %p184 = scmp.ne.s32.totalorder %s175, %s176
      %p185 = scmp.eq.s32.totalorder %s27, 0
      %p186 = por %p184, %p185
      %p187 = scmp.ne.s32.totalorder %s175, %s176
      %p188 = scmp.eq.s32.totalorder %s28, 1
      %p189 = por %p187, %p188
      %p191 = scmp.ne.s32.totalorder %s176, %s190
      %p192 = scmp.eq.s32.totalorder %s28, 0
      %p193 = por %p191, %p192
      %s195 = sadd.s32 %s194, 1
      %p198 = scmp.eq.s32.totalorder %s22, 1
      %p199 = scmp.ne.s32.totalorder %s194, %s196
      %p200 = scmp.eq.s32.totalorder %s22, 0
      %p201 = por %p199, %p200
      %p202 = scmp.ne.s32.totalorder %s194, %s196
      %p203 = scmp.eq.s32.totalorder %s27, 1
      %p204 = por %p202, %p203
      %p205 = scmp.ne.s32.totalorder %s196, %s197
      %p206 = scmp.eq.s32.totalorder %s27, 0
      %p207 = por %p205, %p206
      %p208 = scmp.ne.s32.totalorder %s196, %s197
      %p209 = scmp.eq.s32.totalorder %s28, 1
      %p210 = por %p208, %p209
      %p212 = scmp.ne.s32.totalorder %s197, %s211
      %p213 = scmp.eq.s32.totalorder %s28, 0
      %p214 = por %p212, %p213
      %s216 = sadd.s32 %s215, 1
      %p219 = scmp.eq.s32.totalorder %s22, 1
      %p220 = scmp.ne.s32.totalorder %s215, %s217
      %p221 = scmp.eq.s32.totalorder %s22, 0
      %p222 = por %p220, %p221
      %p223 = scmp.ne.s32.totalorder %s215, %s217
      %p224 = scmp.eq.s32.totalorder %s27, 1
      %p225 = por %p223, %p224
      %p226 = scmp.ne.s32.totalorder %s217, %s218
      %p227 = scmp.eq.s32.totalorder %s27, 0
      %p228 = por %p226, %p227
      %p229 = scmp.ne.s32.totalorder %s217, %s218
      %p230 = scmp.eq.s32.totalorder %s28, 1
      %p231 = por %p229, %p230
      %p233 = scmp.ne.s32.totalorder %s218, %s232
      %p234 = scmp.eq.s32.totalorder %s28, 0
      %p235 = por %p233, %p234
      %s236 = ssub.s32 %s29, %s41
      %s237 = ssub.s32 %s30, %s37
      %s238 = sor.u32 %s236, %s237
      %p239 = scmp.eq.s32.totalorder %s238, 0
      %s241 = sadd.s32 %s240, 1
      %s242 = scalar_select %p239, %s240, %s241
      %p245 = pneg %p239
      %p246 = scmp.eq.s32.totalorder %s22, 1
      %p247 = por %p245, %p246
      %p248 = scmp.ne.s32.totalorder %s240, %s243
      %p249 = scmp.eq.s32.totalorder %s22, 0
      %p250 = por %p248, %p249
      %p251 = scmp.ne.s32.totalorder %s240, %s243
      %p252 = scmp.eq.s32.totalorder %s27, 1
      %p253 = por %p251, %p252
      %p254 = scmp.ne.s32.totalorder %s243, %s244
      %p255 = scmp.eq.s32.totalorder %s27, 0
      %p256 = por %p254, %p255
      %p257 = scmp.ne.s32.totalorder %s243, %s244
      %p258 = scmp.eq.s32.totalorder %s28, 1
      %p259 = por %p257, %p258
      %p261 = scmp.ne.s32.totalorder %s244, %s260
      %p262 = scmp.eq.s32.totalorder %s28, 0
      %p263 = por %p261, %p262
      %s264 = ssub.s32 %s29, %s41
      %s265 = ssub.s32 %s30, %s37
      %s266 = sor.u32 %s264, %s265
      %p267 = scmp.eq.s32.totalorder %s266, 0
      %s269 = sadd.s32 %s268, 1
      %s270 = scalar_select %p267, %s268, %s269
      %p273 = pneg %p267
      %p274 = scmp.eq.s32.totalorder %s22, 1
      %p275 = por %p273, %p274
      %p276 = scmp.ne.s32.totalorder %s268, %s271
      %p277 = scmp.eq.s32.totalorder %s22, 0
      %p278 = por %p276, %p277
      %p279 = scmp.ne.s32.totalorder %s268, %s271
      %p280 = scmp.eq.s32.totalorder %s27, 1
      %p281 = por %p279, %p280
      %p282 = scmp.ne.s32.totalorder %s271, %s272
      %p283 = scmp.eq.s32.totalorder %s27, 0
      %p284 = por %p282, %p283
      %p285 = scmp.ne.s32.totalorder %s271, %s272
      %p286 = scmp.eq.s32.totalorder %s28, 1
      %p287 = por %p285, %p286
      %p289 = scmp.ne.s32.totalorder %s272, %s288
      %p290 = scmp.eq.s32.totalorder %s28, 0
      %p291 = por %p289, %p290
      %p292 = scmp.le.s32.totalorder 1, %s22
      %p293 = scmp.lt.s32.totalorder %s22, 3
      %p294 = pnand %p292, %p293
      %p295 = pneg %p294
      // Predicated region
      $region9: #{self_attention_pallas.1} parent=5 // pred_check
        _
      $region10: #{self_attention_pallas.1} parent=5 // pred_check_branch
        %297 = sbr.rel (%p294) target = $region12
      $region11: #{self_attention_pallas.1} parent=5 // pred_region
        %s298 = ssub.s32 %s22, 1
        // Predicated region
        $region13: #{self_attention_pallas.1} parent=11 // pred_check
          %p299 = pneg %p81
        $region14: #{self_attention_pallas.1} parent=11 // pred_check_branch
          %301 = sbr.rel (%p299) target = $region16
        $region15: #{self_attention_pallas.1} parent=11 // pred_region
          _
        $region16: #{self_attention_pallas.1} parent=11 // pred_fallthru
          _
        // Predicated region
        $region17: #{self_attention_pallas.1} parent=11 // pred_check
          %p302 = pneg %p102
        $region18: #{self_attention_pallas.1} parent=11 // pred_check_branch
          %304 = sbr.rel (%p302) target = $region20
        $region19: #{self_attention_pallas.1} parent=11 // pred_region
          _
        $region20: #{self_attention_pallas.1} parent=11 // pred_fallthru
          _
        // Predicated region
        $region21: #{self_attention_pallas.1} parent=11 // pred_check
          %p305 = pneg %p123
        $region22: #{self_attention_pallas.1} parent=11 // pred_check_branch
          %307 = sbr.rel (%p305) target = $region24
        $region23: #{self_attention_pallas.1} parent=11 // pred_region
          _
        $region24: #{self_attention_pallas.1} parent=11 // pred_fallthru
          _
        // Predicated region
        $region25: #{self_attention_pallas.1} parent=11 // pred_check
          %p308 = pneg %p144
        $region26: #{self_attention_pallas.1} parent=11 // pred_check_branch
          %310 = sbr.rel (%p308) target = $region28
        $region27: #{self_attention_pallas.1} parent=11 // pred_region
          _
        $region28: #{self_attention_pallas.1} parent=11 // pred_fallthru
          _
        // Predicated region
        $region29: #{self_attention_pallas.1} parent=11 // pred_check
          %p311 = pneg %p165
        $region30: #{self_attention_pallas.1} parent=11 // pred_check_branch
          %313 = sbr.rel (%p311) target = $region32
        $region31: #{self_attention_pallas.1} parent=11 // pred_region
          _
        $region32: #{self_attention_pallas.1} parent=11 // pred_fallthru
          _
        // Predicated region
        $region33: #{self_attention_pallas.1} parent=11 // pred_check
          %p314 = pneg %p186
        $region34: #{self_attention_pallas.1} parent=11 // pred_check_branch
          %316 = sbr.rel (%p314) target = $region36
        $region35: #{self_attention_pallas.1} parent=11 // pred_region
          %s318 = ssub.s32 16, 16
          %319 = vsyncadd [#allocation6], %s318
          %s321 = sshll.u32 [#allocation5], 4
          %s322 = int_to_ptr.vmem [resolvable:$true] %s321
          %324 = dma.hbm_to_vmem [thread:$0]  %s6, 16, %s322, [#allocation6]
        $region36: #{self_attention_pallas.1} parent=11 // pred_fallthru
          _
        // Predicated region
        $region37: #{self_attention_pallas.1} parent=11 // pred_check
          %p325 = pneg %p207
        $region38: #{self_attention_pallas.1} parent=11 // pred_check_branch
          %327 = sbr.rel (%p325) target = $region40
        $region39: #{self_attention_pallas.1} parent=11 // pred_region
          %s329 = ssub.s32 256, 256
          %330 = vsyncadd [#allocation9], %s329
          %s331 = sshll.u32 [#allocation8], 4
          %s332 = int_to_ptr.vmem [resolvable:$true] %s331
          %337 = dma.hbm_to_vmem [thread:$0]  %s7, 256, %s332, [#allocation9], 64, 64, 4
        $region40: #{self_attention_pallas.1} parent=11 // pred_fallthru
          _
        // Predicated region
        $region41: #{self_attention_pallas.1} parent=11 // pred_check
          %p338 = pneg %p228
        $region42: #{self_attention_pallas.1} parent=11 // pred_check_branch
          %340 = sbr.rel (%p338) target = $region44
        $region43: #{self_attention_pallas.1} parent=11 // pred_region
          %s342 = ssub.s32 16, 16
          %343 = vsyncadd [#allocation9], %s342
          %s345 = sshll.u32 [#allocation10], 4
          %s346 = int_to_ptr.vmem [resolvable:$true] %s345
          %348 = dma.hbm_to_vmem [thread:$0]  %s8, 16, %s346, [#allocation9]
        $region44: #{self_attention_pallas.1} parent=11 // pred_fallthru
          _
      $region12: #{self_attention_pallas.1} parent=5 // pred_fallthru
        _
      %p349 = scmp.lt.s32.totalorder %s22, 2
      // Predicated region
      $region45: #{self_attention_pallas.1} parent=5 // pred_check
        %p350 = pneg %p349
      $region46: #{self_attention_pallas.1} parent=5 // pred_check_branch
        %352 = sbr.rel (%p350) target = $region48
      $region47: #{self_attention_pallas.1} parent=5 // pred_region
        // Predicated region
        $region49: #{self_attention_pallas.1} parent=47 // pred_check
          %p353 = pneg %p54
        $region50: #{self_attention_pallas.1} parent=47 // pred_check_branch
          %355 = sbr.rel (%p353) target = $region52
        $region51: #{self_attention_pallas.1} parent=47 // pred_region
          %p356 = scmp.lt.s32.totalorder %s29, 1
          %s357 = scalar_select %p356, %s29, 1
          %s358 = smul.addr %s357, 4
          %s359 = scalar_lea.vmem %s0, %s358
        $region52: #{self_attention_pallas.1} parent=47 // pred_fallthru
          _
      $region48: #{self_attention_pallas.1} parent=5 // pred_fallthru
        _
      %p360 = scmp.le.s32.totalorder 1, %s22
      %p361 = scmp.lt.s32.totalorder %s22, 3
      %p362 = pnand %p360, %p361
      %p363 = pneg %p362
      // Predicated region
      $region53: #{self_attention_pallas.1} parent=5 // pred_check
        _
      $region54: #{self_attention_pallas.1} parent=5 // pred_check_branch
        %365 = sbr.rel (%p362) target = $region56
      $region55: #{self_attention_pallas.1} parent=5 // pred_region
        %s366 = ssub.s32 %s22, 1
        // Predicated region
        $region57: #{self_attention_pallas.1} parent=55 // pred_check
          %p367 = pneg %p186
        $region58: #{self_attention_pallas.1} parent=55 // pred_check_branch
          %369 = sbr.rel (%p367) target = $region60
        $region59: #{self_attention_pallas.1} parent=55 // pred_region
          %370 = dma.done [#allocation6], 16
        $region60: #{self_attention_pallas.1} parent=55 // pred_fallthru
          _
        // Predicated region
        $region61: #{self_attention_pallas.1} parent=55 // pred_check
          %p371 = pneg %p207
        $region62: #{self_attention_pallas.1} parent=55 // pred_check_branch
          %373 = sbr.rel (%p371) target = $region64
        $region63: #{self_attention_pallas.1} parent=55 // pred_region
          %374 = dma.done [#allocation9], 256
        $region64: #{self_attention_pallas.1} parent=55 // pred_fallthru
          _
        // Predicated region
        $region65: #{self_attention_pallas.1} parent=55 // pred_check
          %p375 = pneg %p228
        $region66: #{self_attention_pallas.1} parent=55 // pred_check_branch
          %377 = sbr.rel (%p375) target = $region68
        $region67: #{self_attention_pallas.1} parent=55 // pred_region
          %378 = dma.done [#allocation9], 16
        $region68: #{self_attention_pallas.1} parent=55 // pred_fallthru
          _
        %p379 = scmp.lt.s32.totalorder %s31, 1
        %s380 = scalar_select %p379, %s31, 1
        %s381 = smul.addr %s380, 4
        %s382 = scalar_lea.vmem %s0, %s381
        %p383 = pneg %p60
        %p384 = pneg %p57
        %p385 = pneg %p81
        %p386 = pneg %p78
        %p387 = pneg %p102
        %p388 = pneg %p99
        %p389 = pneg %p123
        %p390 = pneg %p120
        %p391 = pneg %p144
        %p392 = pneg %p141
        %p393 = pneg %p165
        %p394 = pneg %p162
        %p395 = pneg %p186
        %p396 = pneg %p183
        %p397 = pneg %p207
        %p398 = pneg %p204
        %p399 = pneg %p228
        %p400 = pneg %p225
        %p401 = pneg %p256
        %p402 = pneg %p253
        %p403 = scmp.lt.s32.totalorder %s31, 1
        %s404 = scalar_select %p403, %s31, 1
        %p405 = scmp.lt.s32.totalorder %s32, 0
        %s406 = scalar_select %p405, %s32, 0
        %s407 = sadd.s32 %s406, %s404
        %s408 = smul.addr %s407, 8
        %s409 = scalar_lea.vmem %s9, %s408
        %p410 = pneg %p284
        %p411 = pneg %p281
        %s412 = sand.u32 %s271, 1
        %s413 = scalar_lea.sflag [#allocation7], %s412
        %s414 = sand.u32 %s271, 1
        %s415 = smul.addr %s414, 8
        %s416 = scalar_lea.vmem [#allocation11], %s415
        %p417 = scmp.lt.s32.totalorder %s31, 1
        %s418 = scalar_select %p417, %s31, 1
        %s419 = smul.addr %s418, 4
        %s420 = scalar_lea.vmem %s0, %s419
        %p421 = scmp.lt.s32.totalorder %s31, 1
        %s422 = scalar_select %p421, %s31, 1
        %p423 = scmp.lt.s32.totalorder %s32, 0
        %s424 = scalar_select %p423, %s32, 0
        %s425 = sadd.s32 %s424, %s422
        %s426 = smul.addr %s425, 8
        %s427 = scalar_lea.vmem %s9, %s426
        %p429 = scmp.eq.s32.totalorder %s32, 0
        // Predicated region
        $region69: #{self_attention_pallas.1} parent=55 // pred_check
          %p430 = pneg %p429
        $region70: #{self_attention_pallas.1} parent=55 // pred_check_branch
          %432 = sbr.rel (%p430) target = $region72
        $region71: #{self_attention_pallas.1} parent=55 // pred_region
          %v433 = vld [vmem:[%s420] sm:$0xf]
          %v434 = vld [vmem:[%s1] sm:$0xf]
          %v435 = vld [vmem:[%s1 + $0x4] sm:$0xf]
          %v436 = vld [vmem:[%s1 + $0x8] sm:$0xf]
          %v437 = vld [vmem:[%s1 + $0xc] sm:$0xf]
          %v438 = vld [vmem:[%s2] sm:$0x1]
          %v440 = vlaneseq
          %v441 = vshrl.u32 %v440, 7
          %v442 = vsub.s32 0, %v441
          %v443 = vrot.slane %v438, %v442
          %v449 = vunpack.c.l.b16 %v434
          %v450 = vunpack.c.l.b16 %v435
          %v451 = vunpack.c.l.b16 %v436
          %v452 = vunpack.c.l.b16 %v437
          %v453 = vpack.c.b16 %v450, %v449
          %v454 = vpack.c.b16 %v452, %v451
          %vm457 = vcmask 261120
          %v459 = vsel %vm457, %v433, 0
          %461 = vmatprep.subr.bf16.mxu0 0
          %462 = vmatpush1.bf16.msra.mxu0 %v453
          %463 = vmatprep.subr.bf16.mxu0 0
          %464 = vmatpush1.bf16.msra.mxu0 %v454
          %465 = vmatprep.subr.bf16.mxu0 0
          %466 = vmatpush1.bf16.msra.mxu0 0
          %467 = vmatprep.subr.bf16.mxu0 0
          %468 = vmatpush1.bf16.msra.mxu0 0
          %469 = vmatprep.subr.bf16.mxu0 0
          %470 = vmatpush1.bf16.msra.mxu0 0
          %471 = vmatprep.subr.bf16.mxu0 0
          %472 = vmatpush1.bf16.msra.mxu0 0
          %473 = vmatprep.subr.bf16.mxu0 0
          %474 = vmatpush1.bf16.msra.mxu0 0
          %475 = vmatprep.subr.bf16.mxu0 0
          %476 = vmatpush1.bf16.msra.mxu0 0
          %477 = vmatprep.subr.bf16.mxu0 0
          %478 = vmatpush1.bf16.msra.mxu0 0
          %479 = vmatprep.subr.bf16.mxu0 0
          %480 = vmatpush1.bf16.msra.mxu0 0
          %481 = vmatprep.subr.bf16.mxu0 0
          %482 = vmatpush1.bf16.msra.mxu0 0
          %483 = vmatprep.subr.bf16.mxu0 0
          %484 = vmatpush1.bf16.msra.mxu0 0
          %485 = vmatprep.subr.bf16.mxu0 0
          %486 = vmatpush1.bf16.msra.mxu0 0
          %487 = vmatprep.subr.bf16.mxu0 0
          %488 = vmatpush1.bf16.msra.mxu0 0
          %489 = vmatprep.subr.bf16.mxu0 0
          %490 = vmatpush1.bf16.msra.mxu0 0
          %491 = vmatprep.subr.bf16.mxu0 0
          %492 = vmatpush1.bf16.msra.mxu0 0
          %493 = vmatprep.mubr.bf16.mxu0 0
          %494 = vmatmul.mubr.bf16.gmra.mrb[0].mxu0 %v459
          %v495 = vpop.f32.mrb[0].mxu0
          %v496 = vadd.f32 %v443, %v495
          %v497 = vpop.f32.mrb[0].mxu0
          %v498 = vpop.f32.mrb[0].mxu0
          %v499 = vpop.f32.mrb[0].mxu0
          %500 = vdwg.mxu0
          %vm501 = vcmp.gt.f32.partialorder %v496, 0.0
          %v502 = vmul.f32 %v496, 0.01
          %v503 = vsel %vm501, %v496, %v502
          %v504 = vpack.c.bf16 %v503, %v503
          %v505 = vld [vmem:[%s3] sm:$0xf]
          %v506 = vld [vmem:[%s3 + $0x4] sm:$0xf]
          %v507 = vld [vmem:[%s3 + $0x8] sm:$0xf]
          %v508 = vld [vmem:[%s3 + $0xc] sm:$0xf]
          %v509 = vld [vmem:[%s4] sm:$0x1]
          %v511 = vlaneseq
          %v512 = vshrl.u32 %v511, 7
          %v513 = vsub.s32 0, %v512
          %v514 = vrot.slane %v509, %v513
          %517 = vrot.lane.b32.xlu0 %v504, 96
          %v518 = vpop.permute.xlu0 %517
          %v523 = vunpack.c.l.b16 %v505
          %v524 = vunpack.c.l.b16 %v506
          %v525 = vunpack.c.l.b16 %v507
          %v526 = vunpack.c.l.b16 %v508
          %v527 = vpack.c.b16 %v524, %v523
          %v528 = vpack.c.b16 %v526, %v525
          %v532 = vsel %vm457, %v518, 0
          %534 = vmatprep.subr.bf16.mxu0 0
          %535 = vmatpush1.bf16.msra.mxu0 %v527
          %536 = vmatprep.subr.bf16.mxu0 0
          %537 = vmatpush1.bf16.msra.mxu0 %v528
          %538 = vmatprep.subr.bf16.mxu0 0
          %539 = vmatpush1.bf16.msra.mxu0 0
          %540 = vmatprep.subr.bf16.mxu0 0
          %541 = vmatpush1.bf16.msra.mxu0 0
          %542 = vmatprep.subr.bf16.mxu0 0
          %543 = vmatpush1.bf16.msra.mxu0 0
          %544 = vmatprep.subr.bf16.mxu0 0
          %545 = vmatpush1.bf16.msra.mxu0 0
          %546 = vmatprep.subr.bf16.mxu0 0
          %547 = vmatpush1.bf16.msra.mxu0 0
          %548 = vmatprep.subr.bf16.mxu0 0
          %549 = vmatpush1.bf16.msra.mxu0 0
          %550 = vmatprep.subr.bf16.mxu0 0
          %551 = vmatpush1.bf16.msra.mxu0 0
          %552 = vmatprep.subr.bf16.mxu0 0
          %553 = vmatpush1.bf16.msra.mxu0 0
          %554 = vmatprep.subr.bf16.mxu0 0
          %555 = vmatpush1.bf16.msra.mxu0 0
          %556 = vmatprep.subr.bf16.mxu0 0
          %557 = vmatpush1.bf16.msra.mxu0 0
          %558 = vmatprep.subr.bf16.mxu0 0
          %559 = vmatpush1.bf16.msra.mxu0 0
          %560 = vmatprep.subr.bf16.mxu0 0
          %561 = vmatpush1.bf16.msra.mxu0 0
          %562 = vmatprep.subr.bf16.mxu0 0
          %563 = vmatpush1.bf16.msra.mxu0 0
          %564 = vmatprep.subr.bf16.mxu0 0
          %565 = vmatpush1.bf16.msra.mxu0 0
          %566 = vmatprep.mubr.bf16.mxu0 0
          %567 = vmatmul.mubr.bf16.gmra.mrb[0].mxu0 %v532
          %v568 = vpop.f32.mrb[0].mxu0
          %v569 = vadd.f32 %v514, %v568
          %v570 = vpop.f32.mrb[0].mxu0
          %v571 = vpop.f32.mrb[0].mxu0
          %v572 = vpop.f32.mrb[0].mxu0
          %573 = vdwg.mxu0
          %v574 = vld [vmem:[%s5] sm:$0xf]
          %v575 = vld [vmem:[%s5 + $0x4] sm:$0xf]
          %v576 = vld [vmem:[%s5 + $0x8] sm:$0xf]
          %v577 = vld [vmem:[%s5 + $0xc] sm:$0xf]
          %v578 = vld [vmem:[#allocation5] sm:$0x1]
          %v580 = vlaneseq
          %v581 = vshrl.u32 %v580, 7
          %v582 = vsub.s32 0, %v581
          %v583 = vrot.slane %v578, %v582
          %585 = vrot.lane.b32.xlu0 %v504, 64
          %v586 = vpop.permute.xlu0 %585
          %v591 = vunpack.c.l.b16 %v574
          %v592 = vunpack.c.l.b16 %v575
          %v593 = vunpack.c.l.b16 %v576
          %v594 = vunpack.c.l.b16 %v577
          %v595 = vpack.c.b16 %v592, %v591
          %v596 = vpack.c.b16 %v594, %v593
          %v600 = vsel %vm457, %v586, 0
          %602 = vmatprep.subr.bf16.mxu0 0
          %603 = vmatpush1.bf16.msra.mxu0 %v595
          %604 = vmatprep.subr.bf16.mxu0 0
          %605 = vmatpush1.bf16.msra.mxu0 %v596
          %606 = vmatprep.subr.bf16.mxu0 0
          %607 = vmatpush1.bf16.msra.mxu0 0
          %608 = vmatprep.subr.bf16.mxu0 0
          %609 = vmatpush1.bf16.msra.mxu0 0
          %610 = vmatprep.subr.bf16.mxu0 0
          %611 = vmatpush1.bf16.msra.mxu0 0
          %612 = vmatprep.subr.bf16.mxu0 0
          %613 = vmatpush1.bf16.msra.mxu0 0
          %614 = vmatprep.subr.bf16.mxu0 0
          %615 = vmatpush1.bf16.msra.mxu0 0
          %616 = vmatprep.subr.bf16.mxu0 0
          %617 = vmatpush1.bf16.msra.mxu0 0
          %618 = vmatprep.subr.bf16.mxu0 0
          %619 = vmatpush1.bf16.msra.mxu0 0
          %620 = vmatprep.subr.bf16.mxu0 0
          %621 = vmatpush1.bf16.msra.mxu0 0
          %622 = vmatprep.subr.bf16.mxu0 0
          %623 = vmatpush1.bf16.msra.mxu0 0
          %624 = vmatprep.subr.bf16.mxu0 0
          %625 = vmatpush1.bf16.msra.mxu0 0
          %626 = vmatprep.subr.bf16.mxu0 0
          %627 = vmatpush1.bf16.msra.mxu0 0
          %628 = vmatprep.subr.bf16.mxu0 0
          %629 = vmatpush1.bf16.msra.mxu0 0
          %630 = vmatprep.subr.bf16.mxu0 0
          %631 = vmatpush1.bf16.msra.mxu0 0
          %632 = vmatprep.subr.bf16.mxu0 0
          %633 = vmatpush1.bf16.msra.mxu0 0
          %634 = vmatprep.mubr.bf16.mxu0 0
          %635 = vmatmul.mubr.bf16.gmra.mrb[0].mxu0 %v600
          %v636 = vpop.f32.mrb[0].mxu0
          %v637 = vadd.f32 %v583, %v636
          %v638 = vpop.f32.mrb[0].mxu0
          %v639 = vpop.f32.mrb[0].mxu0
          %v640 = vpop.f32.mrb[0].mxu0
          %641 = vdwg.mxu0
          %v642 = vpack.c.bf16 %v496, %v496
          %vm643 = vcmask 257024
          %644 = vst.msk [vmem:[#allocation2] sm:$0xf] %vm643, %v642
          %v645 = vpack.c.bf16 %v569, %v569
          %646 = vst.msk [vmem:[#allocation3] sm:$0xf] %vm643, %v645
          %v647 = vpack.c.bf16 %v637, %v637
          %648 = vst.msk [vmem:[#allocation4] sm:$0xf] %vm643, %v647
        $region72: #{self_attention_pallas.1} parent=55 // pred_fallthru
          _
        %v649 = vld [vmem:[#allocation2] sm:$0xf]
        %v650 = vld [vmem:[#allocation3] sm:$0xf]
        %vm651 = vcmask 261120
        %v653 = vsel %vm651, %v649, 0
        %v656 = vsel %vm651, %v650, 0
        %658 = vmatprep.subr.bf16.mxu0 0
        %659 = vmatpush1.bf16.xpose.msra.mxu0 %v656
        %660 = vmatprep.subr.bf16.mxu0 0
        %661 = vmatpush1.bf16.xpose.msra.mxu0 0
        %662 = vmatprep.subr.bf16.mxu0 0
        %663 = vmatpush1.bf16.xpose.msra.mxu0 0
        %664 = vmatprep.subr.bf16.mxu0 0
        %665 = vmatpush1.bf16.xpose.msra.mxu0 0
        %666 = vmatprep.subr.bf16.mxu0 0
        %667 = vmatpush1.bf16.xpose.msra.mxu0 0
        %668 = vmatprep.subr.bf16.mxu0 0
        %669 = vmatpush1.bf16.xpose.msra.mxu0 0
        %670 = vmatprep.subr.bf16.mxu0 0
        %671 = vmatpush1.bf16.xpose.msra.mxu0 0
        %672 = vmatprep.subr.bf16.mxu0 0
        %673 = vmatpush1.bf16.xpose.msra.mxu0 0
        %674 = vmatprep.subr.bf16.mxu0 0
        %675 = vmatpush1.bf16.xpose.msra.mxu0 0
        %676 = vmatprep.subr.bf16.mxu0 0
        %677 = vmatpush1.bf16.xpose.msra.mxu0 0
        %678 = vmatprep.subr.bf16.mxu0 0
        %679 = vmatpush1.bf16.xpose.msra.mxu0 0
        %680 = vmatprep.subr.bf16.mxu0 0
        %681 = vmatpush1.bf16.xpose.msra.mxu0 0
        %682 = vmatprep.subr.bf16.mxu0 0
        %683 = vmatpush1.bf16.xpose.msra.mxu0 0
        %684 = vmatprep.subr.bf16.mxu0 0
        %685 = vmatpush1.bf16.xpose.msra.mxu0 0
        %686 = vmatprep.subr.bf16.mxu0 0
        %687 = vmatpush1.bf16.xpose.msra.mxu0 0
        %688 = vmatprep.subr.bf16.mxu0 0
        %689 = vmatpush1.bf16.xpose.msra.mxu0 0
        %690 = vmatprep.mubr.bf16.mxu0 0
        %691 = vmatmul.mubr.bf16.gmra.mrb[0].mxu0 %v653
        %v692 = vpop.f32.mrb[0].mxu0
        %v693 = vadd.f32 0.0, %v692
        %v694 = vpop.f32.mrb[0].mxu0
        %v695 = vpop.f32.mrb[0].mxu0
        %v696 = vpop.f32.mrb[0].mxu0
        %697 = vdwg.mxu0
        %vm698 = vcmask 64512
        %v699 = vsel %vm698, %v693, -inf
        %700 = vmax.xlane.f32.xlu0 %v699
        %v701 = vpop.xlane.xlu0 %700
        %v702 = vsub.f32 %v693, %v701
        %v703 = vmul.f32 %v702, 1.442695
        %v704 = vpow.pop %v703
        %v705 = vsel %vm698, %v704, 0.0
        %706 = vadd.xlane.f32.xlu0 %v705
        %v707 = vpop.xlane.xlu0 %706
        %v708 = vrcp.pop %v707
        %v709 = vpack.c.bf16 %v704, %v704
        %v710 = vld [vmem:[#allocation4] sm:$0xf]
        %v712 = vsel %vm698, %v709, 0
        %vm714 = vcmask 1043456
        %v716 = vsel %vm714, %v710, 0
        %718 = vmatprep.subr.bf16.mxu0 0
        %719 = vmatpush1.bf16.msra.mxu0 %v716
        %720 = vmatprep.subr.bf16.mxu0 0
        %721 = vmatpush1.bf16.msra.mxu0 0
        %722 = vmatprep.subr.bf16.mxu0 0
        %723 = vmatpush1.bf16.msra.mxu0 0
        %724 = vmatprep.subr.bf16.mxu0 0
        %725 = vmatpush1.bf16.msra.mxu0 0
        %726 = vmatprep.subr.bf16.mxu0 0
        %727 = vmatpush1.bf16.msra.mxu0 0
        %728 = vmatprep.subr.bf16.mxu0 0
        %729 = vmatpush1.bf16.msra.mxu0 0
        %730 = vmatprep.subr.bf16.mxu0 0
        %731 = vmatpush1.bf16.msra.mxu0 0
        %732 = vmatprep.subr.bf16.mxu0 0
        %733 = vmatpush1.bf16.msra.mxu0 0
        %734 = vmatprep.subr.bf16.mxu0 0
        %735 = vmatpush1.bf16.msra.mxu0 0
        %736 = vmatprep.subr.bf16.mxu0 0
        %737 = vmatpush1.bf16.msra.mxu0 0
        %738 = vmatprep.subr.bf16.mxu0 0
        %739 = vmatpush1.bf16.msra.mxu0 0
        %740 = vmatprep.subr.bf16.mxu0 0
        %741 = vmatpush1.bf16.msra.mxu0 0
        %742 = vmatprep.subr.bf16.mxu0 0
        %743 = vmatpush1.bf16.msra.mxu0 0
        %744 = vmatprep.subr.bf16.mxu0 0
        %745 = vmatpush1.bf16.msra.mxu0 0
        %746 = vmatprep.subr.bf16.mxu0 0
        %747 = vmatpush1.bf16.msra.mxu0 0
        %748 = vmatprep.subr.bf16.mxu0 0
        %749 = vmatpush1.bf16.msra.mxu0 0
        %750 = vmatprep.mubr.bf16.mxu0 0
        %751 = vmatmul.mubr.bf16.gmra.mrb[0].mxu0 %v712
        %v752 = vpop.f32.mrb[0].mxu0
        %v753 = vadd.f32 0.0, %v752
        %v754 = vpop.f32.mrb[0].mxu0
        %v755 = vpop.f32.mrb[0].mxu0
        %v756 = vpop.f32.mrb[0].mxu0
        %757 = vdwg.mxu0
        %v758 = vmul.f32 %v753, %v708
        %v759 = vpack.c.bf16 %v758, %v758
        %v760 = vld [vmem:[#allocation8] sm:$0xf]
        %v761 = vld [vmem:[#allocation8 + $0x4] sm:$0xf]
        %v762 = vld [vmem:[#allocation8 + $0x8] sm:$0xf]
        %v763 = vld [vmem:[#allocation8 + $0xc] sm:$0xf]
        %v764 = vld [vmem:[#allocation10] sm:$0x1]
        %v766 = vlaneseq
        %v767 = vshrl.u32 %v766, 7
        %v768 = vsub.s32 0, %v767
        %v769 = vrot.slane %v764, %v768
        %v775 = vunpack.c.l.b16 %v760
        %v776 = vunpack.c.l.b16 %v761
        %v777 = vunpack.c.l.b16 %v762
        %v778 = vunpack.c.l.b16 %v763
        %v779 = vpack.c.b16 %v776, %v775
        %v780 = vpack.c.b16 %v778, %v777
        %v784 = vsel %vm651, %v759, 0
        %786 = vmatprep.subr.bf16.mxu0 0
        %787 = vmatpush1.bf16.msra.mxu0 %v779
        %788 = vmatprep.subr.bf16.mxu0 0
        %789 = vmatpush1.bf16.msra.mxu0 %v780
        %790 = vmatprep.subr.bf16.mxu0 0
        %791 = vmatpush1.bf16.msra.mxu0 0
        %792 = vmatprep.subr.bf16.mxu0 0
        %793 = vmatpush1.bf16.msra.mxu0 0
        %794 = vmatprep.subr.bf16.mxu0 0
        %795 = vmatpush1.bf16.msra.mxu0 0
        %796 = vmatprep.subr.bf16.mxu0 0
        %797 = vmatpush1.bf16.msra.mxu0 0
        %798 = vmatprep.subr.bf16.mxu0 0
        %799 = vmatpush1.bf16.msra.mxu0 0
        %800 = vmatprep.subr.bf16.mxu0 0
        %801 = vmatpush1.bf16.msra.mxu0 0
        %802 = vmatprep.subr.bf16.mxu0 0
        %803 = vmatpush1.bf16.msra.mxu0 0
        %804 = vmatprep.subr.bf16.mxu0 0
        %805 = vmatpush1.bf16.msra.mxu0 0
        %806 = vmatprep.subr.bf16.mxu0 0
        %807 = vmatpush1.bf16.msra.mxu0 0
        %808 = vmatprep.subr.bf16.mxu0 0
        %809 = vmatpush1.bf16.msra.mxu0 0
        %810 = vmatprep.subr.bf16.mxu0 0
        %811 = vmatpush1.bf16.msra.mxu0 0
        %812 = vmatprep.subr.bf16.mxu0 0
        %813 = vmatpush1.bf16.msra.mxu0 0
        %814 = vmatprep.subr.bf16.mxu0 0
        %815 = vmatpush1.bf16.msra.mxu0 0
        %816 = vmatprep.subr.bf16.mxu0 0
        %817 = vmatpush1.bf16.msra.mxu0 0
        %818 = vmatprep.mubr.bf16.mxu0 0
        %819 = vmatmul.mubr.bf16.gmra.mrb[0].mxu0 %v784
        %v820 = vpop.f32.mrb[0].mxu0
        %v821 = vadd.f32 %v769, %v820
        %v822 = vpop.f32.mrb[0].mxu0
        %v823 = vpop.f32.mrb[0].mxu0
        %v824 = vpop.f32.mrb[0].mxu0
        %825 = vdwg.mxu0
        %826 = vst.msk [vmem:[%s427] sm:$0xff] %vm651, %v821
        %v827 = vmul.f32 %v704, %v708
        %828 = vst.msk [vmem:[%s416] sm:$0xff] %vm698, %v827
        %p829 = scmp.lt.s32.totalorder %s31, 1
        %s830 = scalar_select %p829, %s31, 1
        %p831 = scmp.lt.s32.totalorder %s32, 0
        %s832 = scalar_select %p831, %s32, 0
        %s833 = sadd.s32 %s832, %s830
        %s834 = smul.addr %s833, 8
        %s835 = scalar_lea.vmem %s9, %s834
        %s836 = sand.u32 %s271, 1
        %s837 = scalar_lea.sflag [#allocation7], %s836
        %s838 = sand.u32 %s271, 1
        %s839 = smul.addr %s838, 8
        %s840 = scalar_lea.vmem [#allocation11], %s839
        // Predicated region
        $region73: #{self_attention_pallas.1} parent=55 // pred_check
          %p841 = pneg %p253
        $region74: #{self_attention_pallas.1} parent=55 // pred_check_branch
          %843 = sbr.rel (%p841) target = $region76
        $region75: #{self_attention_pallas.1} parent=55 // pred_region
          _
        $region76: #{self_attention_pallas.1} parent=55 // pred_fallthru
          _
        // Predicated region
        $region77: #{self_attention_pallas.1} parent=55 // pred_check
          %p844 = pneg %p281
        $region78: #{self_attention_pallas.1} parent=55 // pred_check_branch
          %846 = sbr.rel (%p844) target = $region80
        $region79: #{self_attention_pallas.1} parent=55 // pred_region
          %s848 = ssub.s32 128, 128
          %849 = vsyncadd %s837, %s848
          %s850 = sadd.s32 %s32, %s31
          %s851 = smul.addr %s850, 128
          %s852 = scalar_lea.hbm %s10, %s851
          %s854 = sshll.u32 %s840, 4
          %s855 = int_to_ptr.vmem [resolvable:$true] %s854
          %857 = dma.vmem_to_hbm [thread:$0]  %s855, 128, %s852, %s837
        $region80: #{self_attention_pallas.1} parent=55 // pred_fallthru
          _
      $region56: #{self_attention_pallas.1} parent=5 // pred_fallthru
        _
      %p858 = scmp.le.s32.totalorder 2, %s22
      // Predicated region
      $region81: #{self_attention_pallas.1} parent=5 // pred_check
        %p859 = pneg %p858
      $region82: #{self_attention_pallas.1} parent=5 // pred_check_branch
        %861 = sbr.rel (%p859) target = $region84
      $region83: #{self_attention_pallas.1} parent=5 // pred_region
        %s862 = ssub.s32 %s22, 2
        // Predicated region
        $region85: #{self_attention_pallas.1} parent=83 // pred_check
          %p863 = pneg %p259
        $region86: #{self_attention_pallas.1} parent=83 // pred_check_branch
          %865 = sbr.rel (%p863) target = $region88
        $region87: #{self_attention_pallas.1} parent=83 // pred_region
          %p866 = scmp.lt.s32.totalorder %s33, 1
          %s867 = scalar_select %p866, %s33, 1
          %p868 = scmp.lt.s32.totalorder %s34, 0
          %s869 = scalar_select %p868, %s34, 0
          %s870 = sadd.s32 %s869, %s867
          %s871 = smul.addr %s870, 8
          %s872 = scalar_lea.vmem %s9, %s871
        $region88: #{self_attention_pallas.1} parent=83 // pred_fallthru
          _
        // Predicated region
        $region89: #{self_attention_pallas.1} parent=83 // pred_check
          %p873 = pneg %p287
        $region90: #{self_attention_pallas.1} parent=83 // pred_check_branch
          %875 = sbr.rel (%p873) target = $region92
        $region91: #{self_attention_pallas.1} parent=83 // pred_region
          %s876 = sand.u32 %s272, 1
          %s877 = scalar_lea.sflag [#allocation7], %s876
          %s878 = sand.u32 %s272, 1
          %s879 = smul.addr %s878, 8
          %s880 = scalar_lea.vmem [#allocation11], %s879
          %881 = dma.done %s877, 128
        $region92: #{self_attention_pallas.1} parent=83 // pred_fallthru
          _
      $region84: #{self_attention_pallas.1} parent=5 // pred_fallthru
        _
    $region6: #{self_attention_pallas.1} parent=1 // loop_footer
      %s26 = sadd.s32 1, %s22
    $region7: #{self_attention_pallas.1} parent=1 // loop_footer_branch
      %21 = sbr.rel target = $region3
    $region8: #{self_attention_pallas.1} parent=1 // loop_exit
      _
    %882 = vsyncpa [#allocation6], 1
    %s883 = scalar_lea.sflag [#allocation6], 1
    %884 = vsyncpa %s883, 1
    %885 = vsyncpa [#allocation9], 1
    %886 = vsyncpa [#allocation7], 1
    %s887 = scalar_lea.sflag [#allocation7], 1
    %888 = vsyncpa %s887, 1

</llo_original>
